<compile_context>
chip_gen: v6e
topology: v6e:2x2x1
jax: 0.10.0
libtpu: 0.0.40
codegen_flags: <defaults>
</compile_context>

<pallas_src>
import jax
import jax.numpy as jnp
from jax.experimental import pallas as pl
from jax.experimental.pallas import tpu as pltpu


def unet_innermost_block(x_nchw, wd, wu, gamma, beta):
    """x_nchw: (N, Cin, H, W); wd: (Ci, Cin, 4, 4) Conv2d weight;
    wu: (Ci, Cout, 4, 4) ConvTranspose2d weight; gamma/beta: (Cout,) BN affine."""
    N, Cin, H, W = x_nchw.shape
    Ci = wd.shape[0]
    Cout = wu.shape[1]
    Ho, Wo = H // 2, W // 2

    # Extended per-image grid = the zero-padded down-conv output ("dp") grid.
    TgH, TgW = Ho + 2, Wo + 2
    SPI = TgH * TgW                    # flat positions per image
    Mg = N * SPI                       # real extended columns
    Mgp = ((Mg + 127) // 128) * 128    # lane-padded compute width (lane-dense)
    Lf = Mgp + 128                     # input flat length (slack for shifted reads)

    # ---------------- wrapper-side layout plumbing (pure XLA) ------------------------------
    x_nhwc = jnp.transpose(x_nchw, (0, 2, 3, 1))
    xl = jnp.where(x_nhwc >= 0.0, x_nhwc, 0.2 * x_nhwc)       # LeakyReLU(0.2), applied ONCE
    xbig = jnp.pad(xl, ((0, 0), (3, 3), (3, 3), (0, 0)))      # covers conv pad + grid slack

    # Row/column parity planes, channel-major, flattened as n*SPI + A*TgW + B.
    xin_planes = []
    for ri in range(2):
        rows = []
        for rj in range(2):
            sub = xbig[:, ri:ri + 2 * TgH:2, rj:rj + 2 * TgW:2, :]   # (N, TgH, TgW, Cin)
            rows.append(jnp.transpose(sub, (3, 0, 1, 2)).reshape(Cin, Mg))
        plane = jnp.concatenate(rows, axis=0)                        # (2*Cin, Mg)
        xin_planes.append(jnp.pad(plane, ((0, 0), (0, Lf - Mg))))
    Xin = jnp.stack(xin_planes, axis=0)                              # (2, 2*Cin, Lf)

    # Down weight folded for a single K=16*Cin contraction; column order (qi, qj, ri, rj, c)
    # with kh = 2*qi + ri, kw = 2*qj + rj.
    WdT = jnp.transpose(wd.reshape(Ci, Cin, 2, 2, 2, 2),
                        (0, 2, 4, 3, 5, 1)).reshape(Ci, 16 * Cin)    # (Ci, 16*Cin)

    # Up (transposed-conv) weights folded so all 4 output parities are ONE matmul:
    #   rows   = p*Cout + co           (p = 2*ph + pw : output parity)
    #   cols   = s*Ci + ci             (s = 3*dr + dc : shift of the padded down map)
    # For parity (ph,pw) and window offset (th,tw) in {0,1}^2 the contribution uses kernel
    # index (3-ph-2*th, 3-pw-2*tw) at shift (dr,dc) = (ph+th, pw+tw); other shifts are zero.
    Wcomb = jnp.zeros((4 * Cout, 9 * Ci), jnp.float32)
    for ph in range(2):
        for pw in range(2):
            p = 2 * ph + pw
            for th in range(2):
                for tw in range(2):
                    s = 3 * (ph + th) + (pw + tw)
                    blk = jnp.transpose(wu[:, :, 3 - ph - 2 * th, 3 - pw - 2 * tw])  # (Cout, Ci)
                    Wcomb = Wcomb.at[p * Cout:(p + 1) * Cout, s * Ci:(s + 1) * Ci].set(blk)

    # Masks over the extended grid (1 = real position).
    idx = jnp.arange(SPI)
    uu, vv = idx // TgW, idx % TgW
    dpm = ((uu >= 1) & (uu <= Ho) & (vv >= 1) & (vv <= Wo)).astype(jnp.float32)  # interior of dp
    upm = ((uu < Ho) & (vv < Wo)).astype(jnp.float32)                            # valid up outputs
    dpmask = jnp.pad(jnp.tile(dpm, N), (0, Mgp - Mg)).reshape(1, Mgp)
    upmask = jnp.pad(jnp.tile(upm, N), (0, Mgp - Mg)).reshape(1, Mgp)

    count = float(4 * N * Ho * Wo)     # = N*H*W elements per channel for the batch stats

    # ---------------- fused kernel: down conv -> ReLU -> up conv -> BatchNorm -------------
    def fused_kernel(x_ref, wdT_ref, wcomb_ref, dpm_ref, upm_ref, g_ref, b_ref,
                     o_ref, dpT_ref):
        dpm_v = dpm_ref[...]                                         # (1, Mgp)
        upm_v = upm_ref[...]                                         # (1, Mgp)

        # Down path: gather the 16 conv taps as shifted VMEM slices (8 slabs of 2 taps each),
        # then ONE K=16*Cin matmul on the MXU.  Pixels sit on the lane axis (Mgp lanes).
        slabs = []
        for qi in range(2):
            for qj in range(2):
                sh = qi * TgW + qj
                for ri in range(2):
                    slabs.append(x_ref[ri, :, sh:sh + Mgp])          # (2*Cin, Mgp)
        pT = jnp.concatenate(slabs, axis=0)                          # (16*Cin, Mgp)
        dT = jnp.dot(wdT_ref[...], pT, preferred_element_type=jnp.float32)   # (Ci, Mgp)
        dT = jnp.maximum(dT, 0.0) * dpm_v          # ReLU ("uprelu") + zero the dp pad ring

        # Padded down feature map stays entirely in VMEM; only the read-only slack tail
        # needs explicit zeroing (the [Mg, Mgp) pad lanes are already zeroed by dpm).
        dpT_ref[:, Mgp:Mgp + 128] = jnp.zeros((dT.shape[0], 128), jnp.float32)
        dpT_ref[:, :Mgp] = dT

        # Up path: ONE matmul covering all 4 output parities over the 9 distinct shifts
        # of the padded down map (K = 9*Ci).
        qs = []
        for dr in range(3):
            for dc in range(3):
                sh = dr * TgW + dc
                qs.append(dpT_ref[:, sh:sh + Mgp])                   # (Ci, Mgp)
        Q9 = jnp.concatenate(qs, axis=0)                             # (9*Ci, Mgp)
        raw = jnp.dot(wcomb_ref[...], Q9, preferred_element_type=jnp.float32)  # (4*Cout, Mgp)

        # Exact PyTorch training-mode BatchNorm (biased variance, eps=1e-5) over the batch.
        s1_16 = jnp.sum(raw * upm_v, axis=1, keepdims=True)          # (4*Cout, 1)
        s1 = (s1_16[0:Cout] + s1_16[Cout:2 * Cout]
              + s1_16[2 * Cout:3 * Cout] + s1_16[3 * Cout:4 * Cout])  # (Cout, 1)
        mean = s1 * (1.0 / count)
        mean16 = jnp.concatenate([mean] * 4, axis=0)                 # (4*Cout, 1)
        c = (raw - mean16) * upm_v
        s2_16 = jnp.sum(c * c, axis=1, keepdims=True)
        s2 = (s2_16[0:Cout] + s2_16[Cout:2 * Cout]
              + s2_16[2 * Cout:3 * Cout] + s2_16[3 * Cout:4 * Cout])
        inv = jax.lax.rsqrt(s2 * (1.0 / count) + 1e-5)
        scale = inv * g_ref[...]                                     # (Cout, 1)
        shift = b_ref[...] - mean * scale                            # (Cout, 1)
        scale16 = jnp.concatenate([scale] * 4, axis=0)
        shift16 = jnp.concatenate([shift] * 4, axis=0)
        o_ref[...] = raw * scale16 + shift16                         # full-lane store

    vmem = pl.BlockSpec(memory_space=pltpu.MemorySpace.VMEM)
    out_ext = pl.pallas_call(
        fused_kernel,
        out_shape=jax.ShapeDtypeStruct((4 * Cout, Mgp), jnp.float32),
        in_specs=[vmem] * 7,
        out_specs=vmem,
        scratch_shapes=[pltpu.VMEM((Ci, Mgp + 128), jnp.float32)],
    )(Xin, WdT, Wcomb, dpmask, upmask, gamma.reshape(Cout, 1), beta.reshape(Cout, 1))

    # ---------------- wrapper-side re-interleave + skip connection ------------------------
    up = out_ext[:, :Mg].reshape(4, Cout, N, TgH, TgW)[:, :, :, :Ho, :Wo]
    up = up.reshape(2, 2, Cout, N, Ho, Wo)
    up = jnp.transpose(up, (3, 2, 4, 0, 5, 1)).reshape(N, Cout, H, W)   # rows 2a+ph, cols 2b+pw
    return jnp.concatenate([x_nchw, up], axis=1)                        # cat([x, model(x)], ch)


# ----------------------------------------------------------------------------------
# Pure-JAX reference of the same PyTorch forward (for a sanity check)
# ----------------------------------------------------------------------------------
def reference_forward(x_nchw, wd, wu, gamma, beta):
    hp = jax.lax.Precision.HIGHEST
    h = jnp.where(x_nchw >= 0.0, x_nchw, 0.2 * x_nchw)
    h = jax.lax.conv_general_dilated(
        h, wd, window_strides=(2, 2), padding=((1, 1), (1, 1)),
        dimension_numbers=("NCHW", "OIHW", "NCHW"), precision=hp)
    h = jnp.maximum(h, 0.0)
    w_t = jnp.flip(jnp.transpose(wu, (1, 0, 2, 3)), axis=(2, 3))
    h = jax.lax.conv_general_dilated(
        h, w_t, window_strides=(1, 1), padding=((2, 2), (2, 2)),
        lhs_dilation=(2, 2), dimension_numbers=("NCHW", "OIHW", "NCHW"), precision=hp)
    mean = h.mean(axis=(0, 2, 3), keepdims=True)
    var = ((h - mean) ** 2).mean(axis=(0, 2, 3), keepdims=True)
    h = (h - mean) * jax.lax.rsqrt(var + 1e-5) * gamma.reshape(1, -1, 1, 1) + beta.reshape(1, -1, 1, 1)
    return jnp.concatenate([x_nchw, h], axis=1)


if __name__ == "__main__":
    key = jax.random.PRNGKey(0)
    k1, k2, k3, k4, k5 = jax.random.split(key, 5)

    N, outer_nc, H, W = 2, 4, 16, 16
    inner_nc = 8

    x = jax.random.normal(k1, (N, outer_nc, H, W), jnp.float32)
    # deterministic synthetic params (pix2pix-style N(0, 0.02) conv init; BN gamma~1, beta~0)
    wd = 0.02 * jax.random.normal(k2, (inner_nc, outer_nc, 4, 4), jnp.float32)   # Conv2d weight
    wu = 0.02 * jax.random.normal(k3, (inner_nc, outer_nc, 4, 4), jnp.float32)   # ConvTranspose2d weight
    gamma = 1.0 + 0.1 * jax.random.normal(k4, (outer_nc,), jnp.float32)
    beta = 0.1 * jax.random.normal(k5, (outer_nc,), jnp.float32)

    out = jax.jit(unet_innermost_block)(x, wd, wu, gamma, beta)
    out = jax.block_until_ready(out)

    assert out.shape == (N, 2 * outer_nc, H, W), out.shape

    ref = reference_forward(x, wd, wu, gamma, beta)
    # All-f32 path (f32 MXU accumulation vs HIGHEST-precision XLA conv).
    if not jnp.allclose(out, ref, atol=1e-3, rtol=1e-3):
        max_err = float(jnp.max(jnp.abs(out - ref)))
        raise AssertionError(f"Pallas output mismatch vs reference, max abs err = {max_err}")

    print("KERNEL_OK")
</pallas_src>

<mosaic_0001>
module attributes {stable_mosaic.version = 11 : i64} {
  func.func @fused_kernel(%arg0: memref<2x8x384xf32, #tpu.memory_space<vmem>>, %arg1: memref<8x64xf32, #tpu.memory_space<vmem>>, %arg2: memref<16x72xf32, #tpu.memory_space<vmem>>, %arg3: memref<1x256xf32, #tpu.memory_space<vmem>>, %arg4: memref<1x256xf32, #tpu.memory_space<vmem>>, %arg5: memref<4x1xf32, #tpu.memory_space<vmem>>, %arg6: memref<4x1xf32, #tpu.memory_space<vmem>>, %arg7: memref<16x256xf32, #tpu.memory_space<vmem>>, %arg8: memref<8x384xf32, #tpu.memory_space<vmem>>) attributes {dimension_semantics = [], scalar_prefetch = 0 : i64, scratch_operands = 1 : i64, tpu.core_type = #tpu.core_type<tc>} {
    %c0 = arith.constant 0 : index
    %c0_0 = arith.constant 0 : index
    %0 = vector.load %arg3[%c0, %c0_0] : memref<1x256xf32, #tpu.memory_space<vmem>>, vector<1x256xf32>
    %c0_1 = arith.constant 0 : index
    %c0_2 = arith.constant 0 : index
    %1 = vector.load %arg4[%c0_1, %c0_2] : memref<1x256xf32, #tpu.memory_space<vmem>>, vector<1x256xf32>
    %c0_3 = arith.constant 0 : index
    %c0_4 = arith.constant 0 : index
    %c0_5 = arith.constant 0 : index
    %2 = vector.load %arg0[%c0_3, %c0_4, %c0_5] : memref<2x8x384xf32, #tpu.memory_space<vmem>>, vector<1x8x256xf32>
    %3 = vector.shape_cast %2 : vector<1x8x256xf32> to vector<8x256xf32>
    %c1 = arith.constant 1 : index
    %c0_6 = arith.constant 0 : index
    %c0_7 = arith.constant 0 : index
    %4 = vector.load %arg0[%c1, %c0_6, %c0_7] : memref<2x8x384xf32, #tpu.memory_space<vmem>>, vector<1x8x256xf32>
    %5 = vector.shape_cast %4 : vector<1x8x256xf32> to vector<8x256xf32>
    %c0_8 = arith.constant 0 : index
    %c0_9 = arith.constant 0 : index
    %c1_10 = arith.constant 1 : index
    %6 = vector.load %arg0[%c0_8, %c0_9, %c1_10] : memref<2x8x384xf32, #tpu.memory_space<vmem>>, vector<1x8x256xf32>
    %7 = vector.shape_cast %6 : vector<1x8x256xf32> to vector<8x256xf32>
    %c1_11 = arith.constant 1 : index
    %c0_12 = arith.constant 0 : index
    %c1_13 = arith.constant 1 : index
    %8 = vector.load %arg0[%c1_11, %c0_12, %c1_13] : memref<2x8x384xf32, #tpu.memory_space<vmem>>, vector<1x8x256xf32>
    %9 = vector.shape_cast %8 : vector<1x8x256xf32> to vector<8x256xf32>
    %c0_14 = arith.constant 0 : index
    %c0_15 = arith.constant 0 : index
    %c10 = arith.constant 10 : index
    %10 = vector.load %arg0[%c0_14, %c0_15, %c10] : memref<2x8x384xf32, #tpu.memory_space<vmem>>, vector<1x8x256xf32>
    %11 = vector.shape_cast %10 : vector<1x8x256xf32> to vector<8x256xf32>
    %c1_16 = arith.constant 1 : index
    %c0_17 = arith.constant 0 : index
    %c10_18 = arith.constant 10 : index
    %12 = vector.load %arg0[%c1_16, %c0_17, %c10_18] : memref<2x8x384xf32, #tpu.memory_space<vmem>>, vector<1x8x256xf32>
    %13 = vector.shape_cast %12 : vector<1x8x256xf32> to vector<8x256xf32>
    %c0_19 = arith.constant 0 : index
    %c0_20 = arith.constant 0 : index
    %c11 = arith.constant 11 : index
    %14 = vector.load %arg0[%c0_19, %c0_20, %c11] : memref<2x8x384xf32, #tpu.memory_space<vmem>>, vector<1x8x256xf32>
    %15 = vector.shape_cast %14 : vector<1x8x256xf32> to vector<8x256xf32>
    %c1_21 = arith.constant 1 : index
    %c0_22 = arith.constant 0 : index
    %c11_23 = arith.constant 11 : index
    %16 = vector.load %arg0[%c1_21, %c0_22, %c11_23] : memref<2x8x384xf32, #tpu.memory_space<vmem>>, vector<1x8x256xf32>
    %17 = vector.shape_cast %16 : vector<1x8x256xf32> to vector<8x256xf32>
    %18 = tpu.concatenate %3, %5, %7, %9, %11, %13, %15, %17 in 0 : vector<8x256xf32>, vector<8x256xf32>, vector<8x256xf32>, vector<8x256xf32>, vector<8x256xf32>, vector<8x256xf32>, vector<8x256xf32>, vector<8x256xf32> -> vector<64x256xf32>
    %c0_24 = arith.constant 0 : index
    %c0_25 = arith.constant 0 : index
    %19 = vector.load %arg1[%c0_24, %c0_25] : memref<8x64xf32, #tpu.memory_space<vmem>>, vector<8x64xf32>
    %cst = arith.constant dense<0.000000e+00> : vector<8x256xf32>
    %20 = tpu.matmul %19, %18, %cst {dimension_numbers = #tpu.dot_dimension_numbers<[1], [0], [0], [1], [0, 0, 1, 1], [], []>} : vector<8x64xf32>, vector<64x256xf32>, vector<8x256xf32> -> vector<8x256xf32>
    %cst_26 = arith.constant 0.000000e+00 : f32
    %21 = vector.broadcast %cst_26 : f32 to vector<8x256xf32>
    %22 = arith.maximumf %20, %21 : vector<8x256xf32>
    %23 = vector.broadcast %0 : vector<1x256xf32> to vector<8x256xf32>
    %24 = arith.mulf %22, %23 : vector<8x256xf32>
    %cst_27 = arith.constant 0.000000e+00 : f32
    %25 = vector.broadcast %cst_27 : f32 to vector<8x128xf32>
    %c0_28 = arith.constant 0 : index
    %c256 = arith.constant 256 : index
    %26 = vector.load %arg8[%c0_28, %c256] : memref<8x384xf32, #tpu.memory_space<vmem>>, vector<8x128xf32>
    tpu.vector_store %arg8[%c0_28, %c256], %25 {strides = array<i32>} : memref<8x384xf32, #tpu.memory_space<vmem>>, vector<8x128xf32>,
    %c0_29 = arith.constant 0 : index
    %c0_30 = arith.constant 0 : index
    %27 = vector.load %arg8[%c0_29, %c0_30] : memref<8x384xf32, #tpu.memory_space<vmem>>, vector<8x256xf32>
    tpu.vector_store %arg8[%c0_29, %c0_30], %24 {strides = array<i32>} : memref<8x384xf32, #tpu.memory_space<vmem>>, vector<8x256xf32>,
    %c0_31 = arith.constant 0 : index
    %c0_32 = arith.constant 0 : index
    %28 = vector.load %arg8[%c0_31, %c0_32] : memref<8x384xf32, #tpu.memory_space<vmem>>, vector<8x256xf32>
    %c0_33 = arith.constant 0 : index
    %c1_34 = arith.constant 1 : index
    %29 = vector.load %arg8[%c0_33, %c1_34] : memref<8x384xf32, #tpu.memory_space<vmem>>, vector<8x256xf32>
    %c0_35 = arith.constant 0 : index
    %c2 = arith.constant 2 : index
    %30 = vector.load %arg8[%c0_35, %c2] : memref<8x384xf32, #tpu.memory_space<vmem>>, vector<8x256xf32>
    %c0_36 = arith.constant 0 : index
    %c10_37 = arith.constant 10 : index
    %31 = vector.load %arg8[%c0_36, %c10_37] : memref<8x384xf32, #tpu.memory_space<vmem>>, vector<8x256xf32>
    %c0_38 = arith.constant 0 : index
    %c11_39 = arith.constant 11 : index
    %32 = vector.load %arg8[%c0_38, %c11_39] : memref<8x384xf32, #tpu.memory_space<vmem>>, vector<8x256xf32>
    %c0_40 = arith.constant 0 : index
    %c12 = arith.constant 12 : index
    %33 = vector.load %arg8[%c0_40, %c12] : memref<8x384xf32, #tpu.memory_space<vmem>>, vector<8x256xf32>
    %c0_41 = arith.constant 0 : index
    %c20 = arith.constant 20 : index
    %34 = vector.load %arg8[%c0_41, %c20] : memref<8x384xf32, #tpu.memory_space<vmem>>, vector<8x256xf32>
    %c0_42 = arith.constant 0 : index
    %c21 = arith.constant 21 : index
    %35 = vector.load %arg8[%c0_42, %c21] : memref<8x384xf32, #tpu.memory_space<vmem>>, vector<8x256xf32>
    %c0_43 = arith.constant 0 : index
    %c22 = arith.constant 22 : index
    %36 = vector.load %arg8[%c0_43, %c22] : memref<8x384xf32, #tpu.memory_space<vmem>>, vector<8x256xf32>
    %37 = tpu.concatenate %28, %29, %30, %31, %32, %33, %34, %35, %36 in 0 : vector<8x256xf32>, vector<8x256xf32>, vector<8x256xf32>, vector<8x256xf32>, vector<8x256xf32>, vector<8x256xf32>, vector<8x256xf32>, vector<8x256xf32>, vector<8x256xf32> -> vector<72x256xf32>
    %c0_44 = arith.constant 0 : index
    %c0_45 = arith.constant 0 : index
    %38 = vector.load %arg2[%c0_44, %c0_45] : memref<16x72xf32, #tpu.memory_space<vmem>>, vector<16x72xf32>
    %cst_46 = arith.constant dense<0.000000e+00> : vector<16x256xf32>
    %39 = tpu.matmul %38, %37, %cst_46 {dimension_numbers = #tpu.dot_dimension_numbers<[1], [0], [0], [1], [0, 0, 1, 1], [], []>} : vector<16x72xf32>, vector<72x256xf32>, vector<16x256xf32> -> vector<16x256xf32>
    %40 = vector.broadcast %1 : vector<1x256xf32> to vector<16x256xf32>
    %41 = arith.mulf %39, %40 : vector<16x256xf32>
    %cst_47 = arith.constant dense<0.000000e+00> : vector<16xf32>
    %42 = vector.multi_reduction <add>, %41, %cst_47 [1] : vector<16x256xf32> to vector<16xf32>
    %43 = vector.shape_cast %42 : vector<16xf32> to vector<16x1xf32>
    %44 = vector.extract_strided_slice %43 {offsets = [0, 0], sizes = [4, 1], strides = [1, 1]} : vector<16x1xf32> to vector<4x1xf32>
    %45 = vector.extract_strided_slice %43 {offsets = [4, 0], sizes = [4, 1], strides = [1, 1]} : vector<16x1xf32> to vector<4x1xf32>
    %46 = arith.addf %44, %45 : vector<4x1xf32>
    %47 = vector.extract_strided_slice %43 {offsets = [8, 0], sizes = [4, 1], strides = [1, 1]} : vector<16x1xf32> to vector<4x1xf32>
    %48 = arith.addf %46, %47 : vector<4x1xf32>
    %49 = vector.extract_strided_slice %43 {offsets = [12, 0], sizes = [4, 1], strides = [1, 1]} : vector<16x1xf32> to vector<4x1xf32>
    %50 = arith.addf %48, %49 : vector<4x1xf32>
    %cst_48 = arith.constant 0.001953125 : f32
    %51 = vector.broadcast %cst_48 : f32 to vector<4x1xf32>
    %52 = arith.mulf %50, %51 : vector<4x1xf32>
    %53 = tpu.concatenate %52, %52, %52, %52 in 0 : vector<4x1xf32>, vector<4x1xf32>, vector<4x1xf32>, vector<4x1xf32> -> vector<16x1xf32>
    %54 = vector.broadcast %53 : vector<16x1xf32> to vector<16x256xf32>
    %55 = arith.subf %39, %54 : vector<16x256xf32>
    %56 = vector.broadcast %1 : vector<1x256xf32> to vector<16x256xf32>
    %57 = arith.mulf %55, %56 : vector<16x256xf32>
    %58 = arith.mulf %57, %57 : vector<16x256xf32>
    %cst_49 = arith.constant dense<0.000000e+00> : vector<16xf32>
    %59 = vector.multi_reduction <add>, %58, %cst_49 [1] : vector<16x256xf32> to vector<16xf32>
    %60 = vector.shape_cast %59 : vector<16xf32> to vector<16x1xf32>
    %61 = vector.extract_strided_slice %60 {offsets = [0, 0], sizes = [4, 1], strides = [1, 1]} : vector<16x1xf32> to vector<4x1xf32>
    %62 = vector.extract_strided_slice %60 {offsets = [4, 0], sizes = [4, 1], strides = [1, 1]} : vector<16x1xf32> to vector<4x1xf32>
    %63 = arith.addf %61, %62 : vector<4x1xf32>
    %64 = vector.extract_strided_slice %60 {offsets = [8, 0], sizes = [4, 1], strides = [1, 1]} : vector<16x1xf32> to vector<4x1xf32>
    %65 = arith.addf %63, %64 : vector<4x1xf32>
    %66 = vector.extract_strided_slice %60 {offsets = [12, 0], sizes = [4, 1], strides = [1, 1]} : vector<16x1xf32> to vector<4x1xf32>
    %67 = arith.addf %65, %66 : vector<4x1xf32>
    %cst_50 = arith.constant 0.001953125 : f32
    %68 = vector.broadcast %cst_50 : f32 to vector<4x1xf32>
    %69 = arith.mulf %67, %68 : vector<4x1xf32>
    %cst_51 = arith.constant 9.99999974E-6 : f32
    %70 = vector.broadcast %cst_51 : f32 to vector<4x1xf32>
    %71 = arith.addf %69, %70 : vector<4x1xf32>
    %72 = math.rsqrt %71 : vector<4x1xf32>
    %c0_52 = arith.constant 0 : index
    %c0_53 = arith.constant 0 : index
    %73 = vector.load %arg5[%c0_52, %c0_53] : memref<4x1xf32, #tpu.memory_space<vmem>>, vector<4x1xf32>
    %74 = arith.mulf %72, %73 : vector<4x1xf32>
    %c0_54 = arith.constant 0 : index
    %c0_55 = arith.constant 0 : index
    %75 = vector.load %arg6[%c0_54, %c0_55] : memref<4x1xf32, #tpu.memory_space<vmem>>, vector<4x1xf32>
    %76 = arith.mulf %52, %74 : vector<4x1xf32>
    %77 = arith.subf %75, %76 : vector<4x1xf32>
    %78 = tpu.concatenate %74, %74, %74, %74 in 0 : vector<4x1xf32>, vector<4x1xf32>, vector<4x1xf32>, vector<4x1xf32> -> vector<16x1xf32>
    %79 = tpu.concatenate %77, %77, %77, %77 in 0 : vector<4x1xf32>, vector<4x1xf32>, vector<4x1xf32>, vector<4x1xf32> -> vector<16x1xf32>
    %80 = vector.broadcast %78 : vector<16x1xf32> to vector<16x256xf32>
    %81 = arith.mulf %39, %80 : vector<16x256xf32>
    %82 = vector.broadcast %79 : vector<16x1xf32> to vector<16x256xf32>
    %83 = arith.addf %81, %82 : vector<16x256xf32>
    %c0_56 = arith.constant 0 : index
    %c0_57 = arith.constant 0 : index
    %84 = vector.load %arg7[%c0_56, %c0_57] : memref<16x256xf32, #tpu.memory_space<vmem>>, vector<16x256xf32>
    tpu.vector_store %arg7[%c0_56, %c0_57], %83 {strides = array<i32>} : memref<16x256xf32, #tpu.memory_space<vmem>>, vector<16x256xf32>,
    return
  }
}

</mosaic_0001>

<llo_original>
// kernel: tile.13
$region0: #{tile.13}
  #allocation0 [shape = 's32[1]{0}', space=sflag, size = 0x4, scoped, tag = 'scoped memory for tile.13']
  %s0 = inlined_call_operand.vmem [shape: f32[100], index: 0, kind: input, shape index: {}]
  %s1 = inlined_call_operand.vmem [shape: f32[2,100], index: 1, kind: output, shape index: {}]
  // Predicated region
  $region2: #{tile.13} parent=0 // pred_check
    _
  $region3: #{tile.13} parent=0 // pred_check_branch
    %3 = sbr.rel (0) target = $region5
  $region4: #{tile.13} parent=0 // pred_region
    _
  $region5: #{tile.13} parent=0 // pred_fallthru
    _
  %v4 = vld [vmem:[%s0] ss:$0 sm:$0xff]
  %5 = vst [vmem:[%s1] sm:$0x3] %v4

// kernel: tile.14
$region0: #{tile.14}
  %s0 = inlined_call_operand.vmem [shape: f32[2,100], index: 0, kind: input, shape index: {}]
  %s1 = inlined_call_operand.vmem [shape: f32[200], index: 1, kind: output, shape index: {}]
  $region1: #{tile.14} parent=0
    #allocation0 [shape = 'u8[4096]{0}', space=vmem, size = 0x1000, scoped, tag = 'scoped mem for output reshape']
    #allocation1 [shape = 'u8[4096]{0}', space=vmem, size = 0x1000, scoped, tag = 'scoped mem for input reshape']
    %s3 = sshll.u32 1, 2
    %s4 = ssub.s32 %s3, 1
    %v5 = vld [vmem:[%s0] sm:%s4]
    %6 = vst [vmem:[#allocation1] sm:%s4] %v5
    %v7 = vld [vmem:[#allocation1] sm:$0x1]
    %vm8 = vcmask 818176
    %9 = vst.msk [vmem:[#allocation0] sm:$0x1] %vm8, %v7
    %s10 = scalar_lea.vmem [#allocation1], 1
    %v11 = vld [vmem:[%s10] sm:$0x1]
    %s12 = scalar_lea.vmem [#allocation1], 1
    %v13 = vld [vmem:[%s12] sm:$0x1]
    %vm14 = vcmask 228352
    %v15 = vsel %vm14, %v13, %v11
    %16 = vrot.lane.b32.xlu0 %v15, 100
    %v17 = vpop.permute.xlu0 %16
    %vm18 = vcmask 588800
    %s19 = scalar_lea.vmem [#allocation0], 1
    %20 = vst.msk [vmem:[%s19] sm:$0x1] %vm18, %v17
    %vm21 = vcmask 1048352
    %22 = vst.msk [vmem:[#allocation0] sm:$0x1] %vm21, %v17
    %s24 = sshll.u32 1, 2
    %s25 = ssub.s32 %s24, 1
    %v27 = vld [vmem:[#allocation0] sm:%s25]
    %s28 = sshll.u32 1, 2
    %s29 = ssub.s32 %s28, 1
    %30 = vst [vmem:[%s1] sm:%s29] %v27

// kernel: unet_innermost_block.1
$region0: #{unet_innermost_block.1}
  #allocation0 [shape = 'u32[]', space=smem, size = 0x4, offset = 0x4, fixed_abs, tag = 'smem constant byte address 0x4 - core index']
  #allocation1 [shape = 'u32[144,128]{1,0:T(1,128)}', space=vmem, size = 0x12000, scoped, tag = 'internal scratch']
  #allocation2 [shape = 'f32[8,384]{1,0:T(8,128)}', space=vmem, size = 0x3000, scoped, tag = 'scratch operand']
  %s0 = inlined_call_operand.vmem [shape: f32[2,8,384], index: 0, kind: input, shape index: {}]
  %s1 = inlined_call_operand.vmem [shape: f32[8,64], index: 1, kind: input, shape index: {}]
  %s2 = inlined_call_operand.vmem [shape: f32[16,72], index: 2, kind: input, shape index: {}]
  %s3 = inlined_call_operand.vmem [shape: f32[1,256], index: 3, kind: input, shape index: {}]
  %s4 = inlined_call_operand.vmem [shape: f32[1,256], index: 4, kind: input, shape index: {}]
  %s5 = inlined_call_operand.vmem [shape: f32[4,1], index: 5, kind: input, shape index: {}]
  %s6 = inlined_call_operand.vmem [shape: f32[4,1], index: 6, kind: input, shape index: {}]
  %s7 = inlined_call_operand.vmem [shape: f32[16,256], index: 7, kind: output, shape index: {}]
  %s8 = sld [smem:[#allocation0]]
  $region38: #{unet_innermost_block.1} parent=0
    _
  %s10 = ssub.s32 1, %s8
  %s11 = scalar_select 0, %s10, %s8
  // Predicated region
  $region2: #{unet_innermost_block.1} parent=0 // pred_check
    _
  $region3: #{unet_innermost_block.1} parent=0 // pred_check_branch
    %13 = sbr.rel (0) target = $region5
  $region4: #{unet_innermost_block.1} parent=0 // pred_region
    _
  $region5: #{unet_innermost_block.1} parent=0 // pred_fallthru
    _
  // Predicated region
  $region6: #{unet_innermost_block.1} parent=0 // pred_check
    _
  $region7: #{unet_innermost_block.1} parent=0 // pred_check_branch
    %15 = sbr.rel (0) target = $region9
  $region8: #{unet_innermost_block.1} parent=0 // pred_region
    _
  $region9: #{unet_innermost_block.1} parent=0 // pred_fallthru
    _
  // Predicated region
  $region10: #{unet_innermost_block.1} parent=0 // pred_check
    _
  $region11: #{unet_innermost_block.1} parent=0 // pred_check_branch
    %17 = sbr.rel (0) target = $region13
  $region12: #{unet_innermost_block.1} parent=0 // pred_region
    _
  $region13: #{unet_innermost_block.1} parent=0 // pred_fallthru
    _
  // Predicated region
  $region14: #{unet_innermost_block.1} parent=0 // pred_check
    _
  $region15: #{unet_innermost_block.1} parent=0 // pred_check_branch
    %19 = sbr.rel (0) target = $region17
  $region16: #{unet_innermost_block.1} parent=0 // pred_region
    _
  $region17: #{unet_innermost_block.1} parent=0 // pred_fallthru
    _
  // Predicated region
  $region18: #{unet_innermost_block.1} parent=0 // pred_check
    _
  $region19: #{unet_innermost_block.1} parent=0 // pred_check_branch
    %21 = sbr.rel (0) target = $region21
  $region20: #{unet_innermost_block.1} parent=0 // pred_region
    _
  $region21: #{unet_innermost_block.1} parent=0 // pred_fallthru
    _
  // Predicated region
  $region22: #{unet_innermost_block.1} parent=0 // pred_check
    _
  $region23: #{unet_innermost_block.1} parent=0 // pred_check_branch
    %23 = sbr.rel (0) target = $region25
  $region24: #{unet_innermost_block.1} parent=0 // pred_region
    _
  $region25: #{unet_innermost_block.1} parent=0 // pred_fallthru
    _
  // Predicated region
  $region26: #{unet_innermost_block.1} parent=0 // pred_check
    _
  $region27: #{unet_innermost_block.1} parent=0 // pred_check_branch
    %25 = sbr.rel (0) target = $region29
  $region28: #{unet_innermost_block.1} parent=0 // pred_region
    _
  $region29: #{unet_innermost_block.1} parent=0 // pred_fallthru
    _
  %v26 = vld [vmem:[%s3] sm:$0x3]
  %v27 = vld [vmem:[%s4] sm:$0x3]
  %v28 = vld [vmem:[%s0] sm:$0xff]
  %v29 = vld [vmem:[%s0 + $0x8] sm:$0xff]
  %s30 = scalar_lea.vmem %s0, 24
  %v31 = vld [vmem:[%s30] sm:$0xff]
  %v32 = vld [vmem:[%s30 + $0x8] sm:$0xff]
  %v33 = vld [vmem:[%s0 + $0x10] sm:$0xff]
  %v34 = vld [vmem:[%s30 + $0x10] sm:$0xff]
  %38 = vrot.lane.b32.xlu0 %v28, 127
  %v39 = vpop.permute.xlu0 %38
  %40 = vrot.lane.b32.xlu0 %v29, 127
  %v41 = vpop.permute.xlu0 %40
  %42 = vrot.lane.b32.xlu0 %v33, 127
  %v43 = vpop.permute.xlu0 %42
  %vm44 = vcmask 1039360
  %v45 = vsel %vm44, %v39, %v41
  %v46 = vsel %vm44, %v41, %v43
  %52 = vrot.lane.b32.xlu0 %v31, 127
  %v53 = vpop.permute.xlu0 %52
  %54 = vrot.lane.b32.xlu0 %v32, 127
  %v55 = vpop.permute.xlu0 %54
  %56 = vrot.lane.b32.xlu0 %v34, 127
  %v57 = vpop.permute.xlu0 %56
  %v58 = vsel %vm44, %v53, %v55
  %v59 = vsel %vm44, %v55, %v57
  %62 = vrot.lane.b32.xlu0 %v28, 118
  %v63 = vpop.permute.xlu0 %62
  %64 = vrot.lane.b32.xlu0 %v29, 118
  %v65 = vpop.permute.xlu0 %64
  %66 = vrot.lane.b32.xlu0 %v33, 118
  %v67 = vpop.permute.xlu0 %66
  %vm68 = vcmask 965632
  %v69 = vsel %vm68, %v63, %v65
  %v70 = vsel %vm68, %v65, %v67
  %73 = vrot.lane.b32.xlu0 %v31, 118
  %v74 = vpop.permute.xlu0 %73
  %75 = vrot.lane.b32.xlu0 %v32, 118
  %v76 = vpop.permute.xlu0 %75
  %77 = vrot.lane.b32.xlu0 %v34, 118
  %v78 = vpop.permute.xlu0 %77
  %v79 = vsel %vm68, %v74, %v76
  %v80 = vsel %vm68, %v76, %v78
  %83 = vrot.lane.b32.xlu0 %v28, 117
  %v84 = vpop.permute.xlu0 %83
  %85 = vrot.lane.b32.xlu0 %v29, 117
  %v86 = vpop.permute.xlu0 %85
  %87 = vrot.lane.b32.xlu0 %v33, 117
  %v88 = vpop.permute.xlu0 %87
  %vm89 = vcmask 957440
  %v90 = vsel %vm89, %v84, %v86
  %v91 = vsel %vm89, %v86, %v88
  %94 = vrot.lane.b32.xlu0 %v31, 117
  %v95 = vpop.permute.xlu0 %94
  %96 = vrot.lane.b32.xlu0 %v32, 117
  %v97 = vpop.permute.xlu0 %96
  %98 = vrot.lane.b32.xlu0 %v34, 117
  %v99 = vpop.permute.xlu0 %98
  %v100 = vsel %vm89, %v95, %v97
  %v101 = vsel %vm89, %v97, %v99
  %v104 = vld [vmem:[%s1] sm:$0xff]
  %vm105 = vcmask 523264
  %v107 = vsel %vm105, %v104, 0
  %109 = vmatprep.subr.mxu0 0.0
  %110 = vmatpush1.msra.mxu0 0.0
  %111 = vmatprep.subr.mxu0 0.0
  %112 = vmatpush1.msra.mxu0 0.0
  %113 = vmatprep.subr.mxu0 0.0
  %114 = vmatpush1.msra.mxu0 0.0
  %115 = vmatprep.subr.mxu0 0.0
  %116 = vmatpush1.msra.mxu0 0.0
  %117 = vmatprep.subr.mxu0 0.0
  %118 = vmatpush1.msra.mxu0 0.0
  %119 = vmatprep.subr.mxu0 0.0
  %120 = vmatpush1.msra.mxu0 0.0
  %121 = vmatprep.subr.mxu0 0.0
  %122 = vmatpush1.msra.mxu0 0.0
  %123 = vmatprep.subr.mxu0 0.0
  %124 = vmatpush1.msra.mxu0 0.0
  %125 = vmatprep.subr.mxu0 %v101
  %126 = vmatpush1.msra.mxu0 %v100
  %127 = vmatprep.subr.mxu0 %v91
  %128 = vmatpush1.msra.mxu0 %v90
  %129 = vmatprep.subr.mxu0 %v80
  %130 = vmatpush1.msra.mxu0 %v79
  %131 = vmatprep.subr.mxu0 %v70
  %132 = vmatpush1.msra.mxu0 %v69
  %133 = vmatprep.subr.mxu0 %v59
  %134 = vmatpush1.msra.mxu0 %v58
  %135 = vmatprep.subr.mxu0 %v46
  %136 = vmatpush1.msra.mxu0 %v45
  %137 = vmatprep.subr.mxu0 %v32
  %138 = vmatpush1.msra.mxu0 %v31
  %139 = vmatprep.subr.mxu0 %v29
  %140 = vmatpush1.msra.mxu0 %v28
  %141 = vmatprep.subr.mxu0 0.0
  %142 = vmatpush2.msra.mxu0 0.0
  %143 = vmatprep.subr.mxu0 0.0
  %144 = vmatpush2.msra.mxu0 0.0
  %145 = vmatprep.subr.mxu0 0.0
  %146 = vmatpush2.msra.mxu0 0.0
  %147 = vmatprep.subr.mxu0 0.0
  %148 = vmatpush2.msra.mxu0 0.0
  %149 = vmatprep.subr.mxu0 0.0
  %150 = vmatpush2.msra.mxu0 0.0
  %151 = vmatprep.subr.mxu0 0.0
  %152 = vmatpush2.msra.mxu0 0.0
  %153 = vmatprep.subr.mxu0 0.0
  %154 = vmatpush2.msra.mxu0 0.0
  %155 = vmatprep.subr.mxu0 0.0
  %156 = vmatpush2.msra.mxu0 0.0
  %157 = vmatprep.subr.mxu0 0.0
  %158 = vmatpush2.msra.mxu0 0.0
  %159 = vmatprep.subr.mxu0 0.0
  %160 = vmatpush2.msra.mxu0 0.0
  %161 = vmatprep.subr.mxu0 0.0
  %162 = vmatpush2.msra.mxu0 0.0
  %163 = vmatprep.subr.mxu0 0.0
  %164 = vmatpush2.msra.mxu0 0.0
  %165 = vmatprep.subr.mxu0 0.0
  %166 = vmatpush2.msra.mxu0 0.0
  %167 = vmatprep.subr.mxu0 0.0
  %168 = vmatpush2.msra.mxu0 0.0
  %169 = vmatprep.subr.mxu0 0.0
  %170 = vmatpush2.msra.mxu0 0.0
  %171 = vmatprep.subr.mxu0 0.0
  %172 = vmatpush2.msra.mxu0 0.0
  %173 = vmatprep.mubr.f32.mxu0 0.0
  %174 = vmatmul.mubr.f32.gmra.mxu0 %v107
  %v175 = vpop.f32.mrf.mxu0
  %v176 = vadd.f32 0.0, %v175
  %v177 = vpop.f32.mrf.mxu0
  %v178 = vadd.f32 0.0, %v177
  %179 = vdwg.mxu0
  %v180 = vmax.f32 %v176, 0.0
  %v181 = vmax.f32 %v178, 0.0
  %v183 = vlaneseq
  %v184 = vshrl.u32 %v183, 7
  %v185 = vsub.s32 0, %v184
  %v186 = vrot.slane %v26, %v185
  %v187 = vlaneseq
  %v188 = vshrl.u32 %v187, 7
  %v189 = vsub.s32 1, %v188
  %v190 = vrot.slane %v26, %v189
  %v193 = vmul.f32 %v180, %v186
  %v194 = vmul.f32 %v181, %v190
  %195 = vst [vmem:[#allocation2 + $0x10] sm:$0xff] 0.0
  %196 = vst [vmem:[#allocation2] sm:$0xff] %v193
  %197 = vst [vmem:[#allocation2 + $0x8] sm:$0xff] %v194
  %v198 = vld [vmem:[#allocation2] sm:$0xff]
  %v199 = vld [vmem:[#allocation2 + $0x8] sm:$0xff]
  %v200 = vld [vmem:[#allocation2] sm:$0xff]
  %v201 = vld [vmem:[#allocation2 + $0x8] sm:$0xff]
  %v202 = vld [vmem:[#allocation2 + $0x10] sm:$0xff]
  %206 = vrot.lane.b32.xlu0 %v200, 127
  %v207 = vpop.permute.xlu0 %206
  %208 = vrot.lane.b32.xlu0 %v201, 127
  %v209 = vpop.permute.xlu0 %208
  %210 = vrot.lane.b32.xlu0 %v202, 127
  %v211 = vpop.permute.xlu0 %210
  %v212 = vsel %vm44, %v207, %v209
  %v213 = vsel %vm44, %v209, %v211
  %216 = vrot.lane.b32.xlu0 %v200, 126
  %v217 = vpop.permute.xlu0 %216
  %218 = vrot.lane.b32.xlu0 %v201, 126
  %v219 = vpop.permute.xlu0 %218
  %220 = vrot.lane.b32.xlu0 %v202, 126
  %v221 = vpop.permute.xlu0 %220
  %vm222 = vcmask 1031168
  %v223 = vsel %vm222, %v217, %v219
  %v224 = vsel %vm222, %v219, %v221
  %227 = vrot.lane.b32.xlu0 %v200, 118
  %v228 = vpop.permute.xlu0 %227
  %229 = vrot.lane.b32.xlu0 %v201, 118
  %v230 = vpop.permute.xlu0 %229
  %231 = vrot.lane.b32.xlu0 %v202, 118
  %v232 = vpop.permute.xlu0 %231
  %v233 = vsel %vm68, %v228, %v230
  %v234 = vsel %vm68, %v230, %v232
  %237 = vrot.lane.b32.xlu0 %v200, 117
  %v238 = vpop.permute.xlu0 %237
  %239 = vrot.lane.b32.xlu0 %v201, 117
  %v240 = vpop.permute.xlu0 %239
  %241 = vrot.lane.b32.xlu0 %v202, 117
  %v242 = vpop.permute.xlu0 %241
  %v243 = vsel %vm89, %v238, %v240
  %v244 = vsel %vm89, %v240, %v242
  %247 = vrot.lane.b32.xlu0 %v200, 116
  %v248 = vpop.permute.xlu0 %247
  %249 = vrot.lane.b32.xlu0 %v201, 116
  %v250 = vpop.permute.xlu0 %249
  %251 = vrot.lane.b32.xlu0 %v202, 116
  %v252 = vpop.permute.xlu0 %251
  %vm253 = vcmask 949248
  %v254 = vsel %vm253, %v248, %v250
  %v255 = vsel %vm253, %v250, %v252
  %258 = vrot.lane.b32.xlu0 %v200, 108
  %v259 = vpop.permute.xlu0 %258
  %260 = vrot.lane.b32.xlu0 %v201, 108
  %v261 = vpop.permute.xlu0 %260
  %262 = vrot.lane.b32.xlu0 %v202, 108
  %v263 = vpop.permute.xlu0 %262
  %vm264 = vcmask 883712
  %v265 = vsel %vm264, %v259, %v261
  %v266 = vsel %vm264, %v261, %v263
  %269 = vrot.lane.b32.xlu0 %v200, 107
  %v270 = vpop.permute.xlu0 %269
  %271 = vrot.lane.b32.xlu0 %v201, 107
  %v272 = vpop.permute.xlu0 %271
  %273 = vrot.lane.b32.xlu0 %v202, 107
  %v274 = vpop.permute.xlu0 %273
  %vm275 = vcmask 875520
  %v276 = vsel %vm275, %v270, %v272
  %v277 = vsel %vm275, %v272, %v274
  %280 = vrot.lane.b32.xlu0 %v200, 106
  %v281 = vpop.permute.xlu0 %280
  %282 = vrot.lane.b32.xlu0 %v201, 106
  %v283 = vpop.permute.xlu0 %282
  %284 = vrot.lane.b32.xlu0 %v202, 106
  %v285 = vpop.permute.xlu0 %284
  %vm286 = vcmask 867328
  %v287 = vsel %vm286, %v281, %v283
  %v288 = vsel %vm286, %v283, %v285
  %v291 = vld [vmem:[%s2] sm:$0xff]
  %v292 = vld [vmem:[%s2 + $0x8] sm:$0xff]
  %vm293 = vcmask 588800
  %v295 = vsel %vm293, %v291, 0
  %v298 = vsel %vm293, %v292, 0
  %300 = vmatprep.subr.mxu0 0.0
  %301 = vmatpush1.msra.mxu0 0.0
  %302 = vmatprep.subr.mxu0 0.0
  %303 = vmatpush1.msra.mxu0 0.0
  %304 = vmatprep.subr.mxu0 0.0
  %305 = vmatpush1.msra.mxu0 0.0
  %306 = vmatprep.subr.mxu0 0.0
  %307 = vmatpush1.msra.mxu0 0.0
  %308 = vmatprep.subr.mxu0 0.0
  %309 = vmatpush1.msra.mxu0 0.0
  %310 = vmatprep.subr.mxu0 0.0
  %311 = vmatpush1.msra.mxu0 0.0
  %312 = vmatprep.subr.mxu0 0.0
  %313 = vmatpush1.msra.mxu0 0.0
  %314 = vmatprep.subr.mxu0 %v288
  %315 = vmatpush1.msra.mxu0 %v287
  %316 = vmatprep.subr.mxu0 %v277
  %317 = vmatpush1.msra.mxu0 %v276
  %318 = vmatprep.subr.mxu0 %v266
  %319 = vmatpush1.msra.mxu0 %v265
  %320 = vmatprep.subr.mxu0 %v255
  %321 = vmatpush1.msra.mxu0 %v254
  %322 = vmatprep.subr.mxu0 %v244
  %323 = vmatpush1.msra.mxu0 %v243
  %324 = vmatprep.subr.mxu0 %v234
  %325 = vmatpush1.msra.mxu0 %v233
  %326 = vmatprep.subr.mxu0 %v224
  %327 = vmatpush1.msra.mxu0 %v223
  %328 = vmatprep.subr.mxu0 %v213
  %329 = vmatpush1.msra.mxu0 %v212
  %330 = vmatprep.subr.mxu0 %v199
  %331 = vmatpush1.msra.mxu0 %v198
  %332 = vmatprep.subr.mxu0 0.0
  %333 = vmatpush2.msra.mxu0 0.0
  %334 = vmatprep.subr.mxu0 0.0
  %335 = vmatpush2.msra.mxu0 0.0
  %336 = vmatprep.subr.mxu0 0.0
  %337 = vmatpush2.msra.mxu0 0.0
  %338 = vmatprep.subr.mxu0 0.0
  %339 = vmatpush2.msra.mxu0 0.0
  %340 = vmatprep.subr.mxu0 0.0
  %341 = vmatpush2.msra.mxu0 0.0
  %342 = vmatprep.subr.mxu0 0.0
  %343 = vmatpush2.msra.mxu0 0.0
  %344 = vmatprep.subr.mxu0 0.0
  %345 = vmatpush2.msra.mxu0 0.0
  %346 = vmatprep.subr.mxu0 0.0
  %347 = vmatpush2.msra.mxu0 0.0
  %348 = vmatprep.subr.mxu0 0.0
  %349 = vmatpush2.msra.mxu0 0.0
  %350 = vmatprep.subr.mxu0 0.0
  %351 = vmatpush2.msra.mxu0 0.0
  %352 = vmatprep.subr.mxu0 0.0
  %353 = vmatpush2.msra.mxu0 0.0
  %354 = vmatprep.subr.mxu0 0.0
  %355 = vmatpush2.msra.mxu0 0.0
  %356 = vmatprep.subr.mxu0 0.0
  %357 = vmatpush2.msra.mxu0 0.0
  %358 = vmatprep.subr.mxu0 0.0
  %359 = vmatpush2.msra.mxu0 0.0
  %360 = vmatprep.subr.mxu0 0.0
  %361 = vmatpush2.msra.mxu0 0.0
  %362 = vmatprep.subr.mxu0 0.0
  %363 = vmatpush2.msra.mxu0 0.0
  %364 = vmatprep.mubr.f32.mxu0 0.0
  %365 = vmatmul.mubr.f32.gmra.mxu0 %v295
  %v366 = vpop.f32.mrf.mxu0
  %v367 = vadd.f32 0.0, %v366
  %v368 = vpop.f32.mrf.mxu0
  %v369 = vadd.f32 0.0, %v368
  %370 = vmatprep.mubr.f32.mxu0 0.0
  %371 = vmatmul.mubr.f32.gmra.mxu0 %v298
  %v372 = vpop.f32.mrf.mxu0
  %v373 = vadd.f32 0.0, %v372
  %v374 = vpop.f32.mrf.mxu0
  %v375 = vadd.f32 0.0, %v374
  %376 = vdwg.mxu0
  %v378 = vlaneseq
  %v379 = vshrl.u32 %v378, 7
  %v380 = vsub.s32 0, %v379
  %v381 = vrot.slane %v27, %v380
  %v382 = vlaneseq
  %v383 = vshrl.u32 %v382, 7
  %v384 = vsub.s32 1, %v383
  %v385 = vrot.slane %v27, %v384
  %v388 = vmul.f32 %v367, %v381
  %v389 = vmul.f32 %v369, %v385
  %v390 = vmul.f32 %v373, %v381
  %v391 = vmul.f32 %v375, %v385
  %v392 = vadd.f32 %v388, %v389
  %393 = vadd.xlane.f32.xlu0 %v392
  %v394 = vpop.xlane.xlu0 %393
  %v395 = vadd.f32 %v390, %v391
  %396 = vadd.xlane.f32.xlu0 %v395
  %v397 = vpop.xlane.xlu0 %396
  %v399 = vrot.slane %v394, 4
  %v401 = vadd.f32 %v394, %v399
  %v402 = vadd.f32 %v401, %v397
  %v404 = vrot.slane %v397, 4
  %v406 = vadd.f32 %v402, %v404
  %v407 = vmul.f32 %v406, 0.001953125
  %v409 = vrot.slane %v407, 4
  %vm411 = vcmask 1043456
  %v412 = vsel %vm411, %v407, %v409
  %414 = vset.pattern.permute.xlu0 0
  %415 = vperm.xlu0 %414, %v412
  %v416 = vpop.permute.xlu0 %415
  %v418 = vsub.f32 %v367, %v416
  %v419 = vsub.f32 %v369, %v416
  %v420 = vsub.f32 %v373, %v416
  %v421 = vsub.f32 %v375, %v416
  %v422 = vmul.f32 %v418, %v381
  %v423 = vmul.f32 %v419, %v385
  %v424 = vmul.f32 %v420, %v381
  %v425 = vmul.f32 %v421, %v385
  %v426 = vmul.f32 %v422, %v422
  %v427 = vmul.f32 %v423, %v423
  %v428 = vmul.f32 %v424, %v424
  %v429 = vmul.f32 %v425, %v425
  %v430 = vadd.f32 %v426, %v427
  %431 = vadd.xlane.f32.xlu0 %v430
  %v432 = vpop.xlane.xlu0 %431
  %v433 = vadd.f32 %v428, %v429
  %434 = vadd.xlane.f32.xlu0 %v433
  %v435 = vpop.xlane.xlu0 %434
  %v437 = vrot.slane %v432, 4
  %v439 = vadd.f32 %v432, %v437
  %v440 = vadd.f32 %v439, %v435
  %v442 = vrot.slane %v435, 4
  %v444 = vadd.f32 %v440, %v442
  %v445 = vmul.f32 %v444, 0.001953125
  %v446 = vadd.f32 %v445, 1e-05
  %v447 = vrsqrt.pop %v446
  %v448 = vld [vmem:[%s5] sm:$0xf]
  %v449 = vmul.f32 %v447, %v448
  %v450 = vld [vmem:[%s6] sm:$0xf]
  %v451 = vmul.f32 %v407, %v449
  %v452 = vsub.f32 %v450, %v451
  %v454 = vrot.slane %v449, 4
  %v456 = vsel %vm411, %v449, %v454
  %v458 = vrot.slane %v452, 4
  %v460 = vsel %vm411, %v452, %v458
  %462 = vset.pattern.permute.xlu0 0
  %463 = vperm.xlu0 %462, %v456
  %v464 = vpop.permute.xlu0 %463
  %v466 = vmul.f32 %v367, %v464
  %v467 = vmul.f32 %v369, %v464
  %v468 = vmul.f32 %v373, %v464
  %v469 = vmul.f32 %v375, %v464
  %471 = vset.pattern.permute.xlu0 0
  %472 = vperm.xlu0 %471, %v460
  %v473 = vpop.permute.xlu0 %472
  %v475 = vadd.f32 %v466, %v473
  %v476 = vadd.f32 %v467, %v473
  %v477 = vadd.f32 %v468, %v473
  %v478 = vadd.f32 %v469, %v473
  %479 = vst [vmem:[%s7] sm:$0xff] %v475
  %480 = vst [vmem:[%s7 + $0x8] sm:$0xff] %v476
  %481 = vst [vmem:[%s7 + $0x10] sm:$0xff] %v477
  %482 = vst [vmem:[%s7 + $0x18] sm:$0xff] %v478
  // Predicated region
  $region30: #{unet_innermost_block.1} parent=0 // pred_check
    _
  $region31: #{unet_innermost_block.1} parent=0 // pred_check_branch
    %484 = sbr.rel (0) target = $region33
  $region32: #{unet_innermost_block.1} parent=0 // pred_region
    _
  $region33: #{unet_innermost_block.1} parent=0 // pred_fallthru
    _
  // Predicated region
  $region34: #{unet_innermost_block.1} parent=0 // pred_check
    _
  $region35: #{unet_innermost_block.1} parent=0 // pred_check_branch
    %486 = sbr.rel (0) target = $region37
  $region36: #{unet_innermost_block.1} parent=0 // pred_region
    _
  $region37: #{unet_innermost_block.1} parent=0 // pred_fallthru
    _

</llo_original>
